<compile_context>
chip_gen: v5e
topology: v5e:2x2
jax: 0.10.0
libtpu: 0.0.40
codegen_flags: <defaults>
</compile_context>

<pallas_src>
import functools

import jax
import jax.numpy as jnp
from jax import lax
from jax.experimental import pallas as pl
from jax.experimental.pallas import tpu as pltpu


def _vq_kernel(z_ref, ne_ref, et_ref, esq_ref, zq_ref, idx_ref, sq_ref):
    """One (batch, spatial-tile) block of vector quantization.

    z_ref  : (1, D, TC)  encoder vectors, channels on sublanes, positions on lanes
    ne_ref : (K, D)      -2 * codebook (resident, constant index map)
    et_ref : (D, K)      codebook transposed (resident)
    esq_ref: (K, 1)      precomputed ||e_k||^2 (resident)
    zq_ref : (1, D, TC)  quantized vectors (same layout as z)
    idx_ref: (1, 1, TC)  argmin indices, lane-dense (int32)
    sq_ref : (1, 1, TC)  lane-dense partial sums of ||z - z_q||^2 (summed over D)
    """
    z = z_ref[0].astype(jnp.float32)          # (D, TC)
    neg2e = ne_ref[...].astype(jnp.float32)   # (K, D)  == -2 * embedding
    et = et_ref[...].astype(jnp.float32)      # (D, K)
    esq = esq_ref[...]                        # (K, 1) f32

    # Distances up to a per-position constant: ||e||^2 - 2 e·z  -> (K, TC).
    # (||z||^2 is constant along K so it does not affect the argmin.)
    prod = jnp.dot(neg2e, z, preferred_element_type=jnp.float32)   # (K, TC)
    dist = prod + esq                                              # (K, TC)

    # argmin over the codebook (sublane) axis, first-minimum semantics.
    k = dist.shape[0]
    min_d = jnp.min(dist, axis=0, keepdims=True)                   # (1, TC)
    row = lax.broadcasted_iota(jnp.int32, dist.shape, 0)           # (K, TC)
    idx = jnp.min(jnp.where(dist == min_d, row, k), axis=0, keepdims=True)  # (1, TC)

    # Gather nearest codebook vectors via one-hot matmul (MXU-friendly at K=64).
    # Iota is recomputed so `row` is not live across this section (vreg pressure).
    # TODO(synk): for large K (>~1024) tile K and replace with a VMEM gather.
    onehot = (lax.broadcasted_iota(jnp.int32, dist.shape, 0) == idx).astype(jnp.float32)
    zq = jnp.dot(et, onehot, preferred_element_type=jnp.float32)   # (D, TC)

    zq_ref[0] = zq.astype(zq_ref.dtype)
    idx_ref[0] = idx.astype(jnp.int32)

    # Lane-dense squared-error partial: reduce over sublanes (D) only.
    diff = zq - z
    sq_ref[0] = jnp.sum(diff * diff, axis=0, keepdims=True)        # (1, TC)


@jax.custom_vjp
def _straight_through(z_e, z_q):
    # Forward value equals z_q (== z_e + stop_gradient(z_q - z_e)).
    return z_q


def _st_fwd(z_e, z_q):
    return z_q, None


def _st_bwd(_, g):
    # Gradient flows straight through to z_e; none to z_q.
    return g, jnp.zeros_like(g)


_straight_through.defvjp(_st_fwd, _st_bwd)


def _pick_col_tile(hw, max_tile):
    """Spatial tile: full H*W extent, or the largest 128-multiple divisor <= max_tile."""
    if hw <= max_tile:
        return hw
    start = (max_tile // 128) * 128
    for t in range(start, 0, -128):
        if hw % t == 0:
            return t
    # No 128-multiple divisor of hw: a single full-extent tile is still legal.
    return hw


@functools.partial(jax.jit, static_argnames=("beta", "col_tile"))
def vector_quantizer_forward(z_e, embedding, beta=0.25, col_tile=256):
    """Forward pass of VectorQuantizer.

    z_e       : (B, D, H, W) float32 (NCHW, matching the PyTorch module)
    embedding : (K, D) float32 codebook
    returns   : (z_q_st, loss, indices) with
                z_q_st (B, D, H, W), loss scalar, indices (B, H, W) int32
    """
    B, D, H, W = z_e.shape
    K, D2 = embedding.shape
    assert D == D2, "embed_dim mismatch"
    HW = H * W

    # Free view: NCHW -> (B, D, H*W), no HBM transpose.
    z3 = z_e.reshape(B, D, HW)

    tc = _pick_col_tile(HW, col_tile)
    num_cb = HW // tc
    # v7x megacore: make sure there are >= 2 grid steps when possible.
    if B * num_cb < 2 and tc % 256 == 0:
        tc //= 2
        num_cb = HW // tc

    # Hoisted codebook prep (tiny, one-time, outside the per-tile body).
    neg2e = -2.0 * embedding                                        # (K, D)
    e_t = embedding.T                                               # (D, K)
    e_sq = jnp.sum(embedding * embedding, axis=1, keepdims=True)    # (K, 1)

    n_elem = B * HW
    cost = pl.CostEstimate(
        flops=4 * n_elem * K * D,                 # two (K,D)x(D,TC) matmuls per tile
        transcendentals=0,
        bytes_accessed=8 * n_elem * D + 8 * n_elem + 12 * K * D,
    )

    zq3, idx3, sq3 = pl.pallas_call(
        _vq_kernel,
        out_shape=(
            jax.ShapeDtypeStruct((B, D, HW), z_e.dtype),
            jax.ShapeDtypeStruct((B, 1, HW), jnp.int32),
            jax.ShapeDtypeStruct((B, 1, HW), jnp.float32),
        ),
        grid_spec=pltpu.PrefetchScalarGridSpec(
            num_scalar_prefetch=0,
            grid=(B, num_cb),
            in_specs=[
                pl.BlockSpec((1, D, tc), lambda b, c: (b, 0, c)),   # z block
                pl.BlockSpec((K, D), lambda b, c: (0, 0)),          # -2*codebook
                pl.BlockSpec((D, K), lambda b, c: (0, 0)),          # codebook^T
                pl.BlockSpec((K, 1), lambda b, c: (0, 0)),          # ||e||^2
            ],
            out_specs=[
                pl.BlockSpec((1, D, tc), lambda b, c: (b, 0, c)),   # z_q block
                pl.BlockSpec((1, 1, tc), lambda b, c: (b, 0, c)),   # indices (lane-dense)
                pl.BlockSpec((1, 1, tc), lambda b, c: (b, 0, c)),   # sq partial (lane-dense)
            ],
        ),
        compiler_params=pltpu.CompilerParams(
            dimension_semantics=("parallel", "parallel"),
        ),
        cost_estimate=cost,
    )(z3, neg2e, e_t, e_sq)

    # Free view back to NCHW.
    z_q = zq3.reshape(B, D, H, W)

    # Straight-through estimator: forward value is z_q, grads pass to z_e.
    z_q_st = _straight_through(z_e, z_q)

    # F.mse_loss(z_e.detach(), z_q) + beta * F.mse_loss(z_e, z_q.detach())
    # forward value == (1 + beta) * mean((z_e - z_q)^2)
    loss = (1.0 + beta) * jnp.sum(sq3) / jnp.float32(B * HW * D)

    # TODO(synk): torch.argmin returns int64 indices; int32 used here.
    indices = idx3.reshape(B, H, W)

    return z_q_st, loss, indices


if __name__ == "__main__":
    key = jax.random.PRNGKey(0)
    k_emb, k_z = jax.random.split(key)

    num_embeddings = 64   # K
    embed_dim = 32        # D
    B, H, W = 2, 16, 16

    # deterministic "randn * 0.1" codebook init, as in the module __init__
    embedding = 0.1 * jax.random.normal(k_emb, (num_embeddings, embed_dim),
                                        dtype=jnp.float32)
    z_e = jax.random.normal(k_z, (B, embed_dim, H, W), dtype=jnp.float32)

    z_q_st, loss, indices = vector_quantizer_forward(z_e, embedding, beta=0.25)
    jax.block_until_ready((z_q_st, loss, indices))

    # light sanity checks against a pure-JAX reference
    zf = jnp.transpose(z_e, (0, 2, 3, 1)).reshape(-1, embed_dim)
    d = (jnp.sum(zf ** 2, 1, keepdims=True)
         - 2.0 * zf @ embedding.T
         + jnp.sum(embedding ** 2, 1, keepdims=True).T)
    ref_idx = jnp.argmin(d, axis=1).astype(jnp.int32)
    ref_zq = embedding[ref_idx].reshape(B, H, W, embed_dim).transpose(0, 3, 1, 2)
    ref_loss = (1.0 + 0.25) * jnp.mean((z_e - ref_zq) ** 2)

    assert z_q_st.shape == (B, embed_dim, H, W)
    assert indices.shape == (B, H, W)
    assert jnp.array_equal(indices.reshape(-1), ref_idx)
    assert jnp.allclose(z_q_st, ref_zq, atol=1e-5)
    assert jnp.allclose(loss, ref_loss, atol=1e-5)

    print("KERNEL_OK")
</pallas_src>

<mosaic_0001>
module attributes {stable_mosaic.version = 11 : i64} {
  func.func @_vq_kernel(%arg0: i32, %arg1: i32, %arg2: memref<1x32x256xf32, #tpu.memory_space<vmem>>, %arg3: memref<64x32xf32, #tpu.memory_space<vmem>>, %arg4: memref<32x64xf32, #tpu.memory_space<vmem>>, %arg5: memref<64x1xf32, #tpu.memory_space<vmem>>, %arg6: memref<1x32x256xf32, #tpu.memory_space<vmem>>, %arg7: memref<1x1x256xi32, #tpu.memory_space<vmem>>, %arg8: memref<1x1x256xf32, #tpu.memory_space<vmem>>) attributes {dimension_semantics = [#tpu.dimension_semantics<parallel>, #tpu.dimension_semantics<parallel>], iteration_bounds = array<i64: 2, 1>, scalar_prefetch = 0 : i64, scratch_operands = 0 : i64, tpu.core_type = #tpu.core_type<tc>, window_params = [{transform_indices = @transform_0, window_bounds = array<i64: 1, 32, 256>}, {pipeline_mode = #tpu.pipeline_mode<synchronous>, transform_indices = @transform_1, window_bounds = array<i64: 64, 32>}, {pipeline_mode = #tpu.pipeline_mode<synchronous>, transform_indices = @transform_2, window_bounds = array<i64: 32, 64>}, {pipeline_mode = #tpu.pipeline_mode<synchronous>, transform_indices = @transform_3, window_bounds = array<i64: 64, 1>}, {transform_indices = @transform_4, window_bounds = array<i64: 1, 32, 256>}, {transform_indices = @transform_5, window_bounds = array<i64: 1, 1, 256>}, {transform_indices = @transform_6, window_bounds = array<i64: 1, 1, 256>}]} {
    %c0 = arith.constant 0 : index
    %c0_0 = arith.constant 0 : index
    %c0_1 = arith.constant 0 : index
    %0 = vector.load %arg2[%c0, %c0_0, %c0_1] : memref<1x32x256xf32, #tpu.memory_space<vmem>>, vector<1x32x256xf32>
    %1 = vector.shape_cast %0 : vector<1x32x256xf32> to vector<32x256xf32>
    %c0_2 = arith.constant 0 : index
    %c0_3 = arith.constant 0 : index
    %2 = vector.load %arg3[%c0_2, %c0_3] : memref<64x32xf32, #tpu.memory_space<vmem>>, vector<64x32xf32>
    %c0_4 = arith.constant 0 : index
    %c0_5 = arith.constant 0 : index
    %3 = vector.load %arg4[%c0_4, %c0_5] : memref<32x64xf32, #tpu.memory_space<vmem>>, vector<32x64xf32>
    %c0_6 = arith.constant 0 : index
    %c0_7 = arith.constant 0 : index
    %4 = vector.load %arg5[%c0_6, %c0_7] : memref<64x1xf32, #tpu.memory_space<vmem>>, vector<64x1xf32>
    %cst = arith.constant dense<0.000000e+00> : vector<64x256xf32>
    %5 = tpu.matmul %2, %1, %cst {dimension_numbers = #tpu.dot_dimension_numbers<[1], [0], [0], [1], [0, 0, 1, 1], [], []>} : vector<64x32xf32>, vector<32x256xf32>, vector<64x256xf32> -> vector<64x256xf32>
    %6 = vector.broadcast %4 : vector<64x1xf32> to vector<64x256xf32>
    %7 = arith.addf %5, %6 : vector<64x256xf32>
    %cst_8 = arith.constant dense<0x7F800000> : vector<256xf32>
    %8 = vector.multi_reduction <minimumf>, %7, %cst_8 [0] : vector<64x256xf32> to vector<256xf32>
    %9 = vector.shape_cast %8 : vector<256xf32> to vector<1x256xf32>
    %10 = tpu.iota {dimensions = array<i32: 0>} : vector<64x256xi32>
    %11 = vector.broadcast %9 : vector<1x256xf32> to vector<64x256xf32>
    %12 = arith.cmpf oeq, %7, %11 : vector<64x256xf32>
    %c64_i32 = arith.constant 64 : i32
    %13 = vector.broadcast %c64_i32 : i32 to vector<64x256xi32>
    %14 = arith.select %12, %10, %13 : vector<64x256xi1>, vector<64x256xi32>
    %cst_9 = arith.constant dense<2147483647> : vector<256xi32>
    %15 = vector.multi_reduction <minsi>, %14, %cst_9 [0] : vector<64x256xi32> to vector<256xi32>
    %16 = vector.shape_cast %15 : vector<256xi32> to vector<1x256xi32>
    %17 = tpu.iota {dimensions = array<i32: 0>} : vector<64x256xi32>
    %18 = vector.broadcast %16 : vector<1x256xi32> to vector<64x256xi32>
    %19 = arith.cmpi eq, %17, %18 : vector<64x256xi32>
    %20 = arith.extui %19 : vector<64x256xi1> to vector<64x256xi32>
    %21 = arith.sitofp %20 : vector<64x256xi32> to vector<64x256xf32>
    %cst_10 = arith.constant dense<0.000000e+00> : vector<32x256xf32>
    %22 = tpu.matmul %3, %21, %cst_10 {dimension_numbers = #tpu.dot_dimension_numbers<[1], [0], [0], [1], [0, 0, 1, 1], [], []>} : vector<32x64xf32>, vector<64x256xf32>, vector<32x256xf32> -> vector<32x256xf32>
    %c0_11 = arith.constant 0 : index
    %c0_12 = arith.constant 0 : index
    %c0_13 = arith.constant 0 : index
    %23 = vector.load %arg6[%c0_11, %c0_12, %c0_13] : memref<1x32x256xf32, #tpu.memory_space<vmem>>, vector<1x32x256xf32>
    %24 = vector.shape_cast %23 : vector<1x32x256xf32> to vector<32x256xf32>
    %25 = vector.shape_cast %22 : vector<32x256xf32> to vector<1x32x256xf32>
    tpu.vector_store %arg6[%c0_11, %c0_12, %c0_13], %25 {strides = array<i32>} : memref<1x32x256xf32, #tpu.memory_space<vmem>>, vector<1x32x256xf32>,
    %c0_14 = arith.constant 0 : index
    %c0_15 = arith.constant 0 : index
    %c0_16 = arith.constant 0 : index
    %26 = vector.load %arg7[%c0_14, %c0_15, %c0_16] : memref<1x1x256xi32, #tpu.memory_space<vmem>>, vector<1x1x256xi32>
    %27 = vector.shape_cast %26 : vector<1x1x256xi32> to vector<1x256xi32>
    %28 = vector.shape_cast %16 : vector<1x256xi32> to vector<1x1x256xi32>
    tpu.vector_store %arg7[%c0_14, %c0_15, %c0_16], %28 {strides = array<i32>} : memref<1x1x256xi32, #tpu.memory_space<vmem>>, vector<1x1x256xi32>,
    %29 = arith.subf %22, %1 : vector<32x256xf32>
    %30 = arith.mulf %29, %29 : vector<32x256xf32>
    %cst_17 = arith.constant dense<0.000000e+00> : vector<256xf32>
    %31 = vector.multi_reduction <add>, %30, %cst_17 [0] : vector<32x256xf32> to vector<256xf32>
    %32 = vector.shape_cast %31 : vector<256xf32> to vector<1x256xf32>
    %c0_18 = arith.constant 0 : index
    %c0_19 = arith.constant 0 : index
    %c0_20 = arith.constant 0 : index
    %33 = vector.load %arg8[%c0_18, %c0_19, %c0_20] : memref<1x1x256xf32, #tpu.memory_space<vmem>>, vector<1x1x256xf32>
    %34 = vector.shape_cast %33 : vector<1x1x256xf32> to vector<1x256xf32>
    %35 = vector.shape_cast %32 : vector<1x256xf32> to vector<1x1x256xf32>
    tpu.vector_store %arg8[%c0_18, %c0_19, %c0_20], %35 {strides = array<i32>} : memref<1x1x256xf32, #tpu.memory_space<vmem>>, vector<1x1x256xf32>,
    return
  }
  func.func @transform_0(%arg0: i32, %arg1: i32) -> (i32, i32, i32) {
    %c0_i32 = arith.constant 0 : i32
    %c0_i32_0 = arith.constant 0 : i32
    return %arg0, %c0_i32, %arg1 : i32, i32, i32
  }
  func.func @transform_1(%arg0: i32, %arg1: i32) -> (i32, i32) {
    %c0_i32 = arith.constant 0 : i32
    %c0_i32_0 = arith.constant 0 : i32
    %c0_i32_1 = arith.constant 0 : i32
    return %c0_i32, %c0_i32_0 : i32, i32
  }
  func.func @transform_2(%arg0: i32, %arg1: i32) -> (i32, i32) {
    %c0_i32 = arith.constant 0 : i32
    %c0_i32_0 = arith.constant 0 : i32
    %c0_i32_1 = arith.constant 0 : i32
    return %c0_i32, %c0_i32_0 : i32, i32
  }
  func.func @transform_3(%arg0: i32, %arg1: i32) -> (i32, i32) {
    %c0_i32 = arith.constant 0 : i32
    %c0_i32_0 = arith.constant 0 : i32
    %c0_i32_1 = arith.constant 0 : i32
    return %c0_i32, %c0_i32_0 : i32, i32
  }
  func.func @transform_4(%arg0: i32, %arg1: i32) -> (i32, i32, i32) {
    %c0_i32 = arith.constant 0 : i32
    %c0_i32_0 = arith.constant 0 : i32
    return %arg0, %c0_i32, %arg1 : i32, i32, i32
  }
  func.func @transform_5(%arg0: i32, %arg1: i32) -> (i32, i32, i32) {
    %c0_i32 = arith.constant 0 : i32
    %c0_i32_0 = arith.constant 0 : i32
    return %arg0, %c0_i32, %arg1 : i32, i32, i32
  }
  func.func @transform_6(%arg0: i32, %arg1: i32) -> (i32, i32, i32) {
    %c0_i32 = arith.constant 0 : i32
    %c0_i32_0 = arith.constant 0 : i32
    return %arg0, %c0_i32, %arg1 : i32, i32, i32
  }
}

</mosaic_0001>

<llo_original>
// kernel: vector_quantizer_forward.1
$region0: #{vector_quantizer_forward.1}
  #allocation0 [shape = 'u32[]', space=smem, size = 0x4, offset = 0x4, fixed_abs, tag = 'smem constant byte address 0x4 - core index']
  #allocation1 [shape = 'u32[72,128]{1,0:T(1,128)}', space=vmem, size = 0x9000, scoped, tag = 'internal scratch']
  %s0 = inlined_call_operand.vmem [shape: f32[2,32,256], index: 0, kind: input, shape index: {}]
  %s1 = inlined_call_operand.vmem [shape: f32[64,32], index: 1, kind: input, shape index: {}]
  %s2 = inlined_call_operand.vmem [shape: f32[32,64], index: 2, kind: input, shape index: {}]
  %s3 = inlined_call_operand.vmem [shape: f32[64,1], index: 3, kind: input, shape index: {}]
  %s4 = inlined_call_operand.vmem [shape: f32[2,32,256], index: 4, kind: output, shape index: {0}]
  %s5 = inlined_call_operand.vmem [shape: s32[2,1,256], index: 5, kind: output, shape index: {1}]
  %s6 = inlined_call_operand.vmem [shape: f32[2,1,256], index: 6, kind: output, shape index: {2}]
  %7 = xla_tuple %s4, %s5, %s6
  %s8 = sld [smem:[#allocation0]]
  $region65: #{vector_quantizer_forward.1} parent=0
    _
  %s10 = ssub.s32 1, %s8
  %s11 = scalar_select 0, %s10, %s8
  loop: start=0, step=1, limit=4
  $region2: #{vector_quantizer_forward.1} parent=0 // loop_pre_header
    _
  $region3: #{vector_quantizer_forward.1} parent=0 // loop_header
    %s13 = sphi 0, %s17
    %p14 = scmp.ge.s32.totalorder %s13, 4
    %s20 = sphi 0, %s32
    %s21 = sphi 0, %s28
    %s22 = sphi 0, %s20
    %s23 = sphi 0, %s21
    %s24 = sphi 0, %s22
    %s25 = sphi 0, %s23
    %s37 = sphi 0, %s39
    %s40 = sphi 0, %s37
    %s41 = sphi 0, %s40
    %s57 = sphi 0, %s41
    %s61 = sphi 0, %s61
    %s63 = sphi 0, %s61
    %s64 = sphi 0, %s63
    %s78 = sphi 0, %s64
    %s82 = sphi 0, %s82
    %s84 = sphi 0, %s82
    %s85 = sphi 0, %s84
    %s99 = sphi 0, %s85
    %s103 = sphi 0, %s103
    %s105 = sphi 0, %s103
    %s106 = sphi 0, %s105
    %s120 = sphi 0, %s106
    %s128 = sphi 0, %s130
    %s131 = sphi 0, %s128
    %s132 = sphi 0, %s131
    %s148 = sphi 0, %s132
    %s156 = sphi 0, %s158
    %s159 = sphi 0, %s156
    %s160 = sphi 0, %s159
    %s176 = sphi 0, %s160
    %s184 = sphi 0, %s186
    %s187 = sphi 0, %s184
    %s188 = sphi 0, %s187
    %s204 = sphi 0, %s188
  $region4: #{vector_quantizer_forward.1} parent=0 // loop_header_branch
    %16 = sbr.rel (%p14) target = $region8
  $region5: #{vector_quantizer_forward.1} parent=0 // loop_body
    %s18 = ssub.s32 %s13, 1
    %s19 = ssub.s32 %s13, 2
    %s26 = sadd.s32 1, %s21
    %p27 = scmp.ge.s32.totalorder %s26, 1
    %s28 = scalar_select %p27, 0, %s26
    %s29 = sadd.s32 1, %s20
    %s30 = scalar_select %p27, %s29, %s20
    %p31 = scmp.ge.s32.totalorder %s30, 2
    %s32 = scalar_select %p31, 0, %s30
    %s33 = ssub.s32 %s20, %s32
    %s34 = ssub.s32 %s21, %s28
    %s35 = sor.u32 %s33, %s34
    %p36 = scmp.eq.s32.totalorder %s35, 0
    %s38 = sadd.s32 %s37, 1
    %s39 = scalar_select %p36, %s37, %s38
    %p42 = pneg %p36
    %p43 = scmp.eq.s32.totalorder %s13, 1
    %p44 = por %p42, %p43
    %p45 = scmp.ne.s32.totalorder %s37, %s40
    %p46 = scmp.eq.s32.totalorder %s13, 0
    %p47 = por %p45, %p46
    %p48 = scmp.ne.s32.totalorder %s37, %s40
    %p49 = scmp.eq.s32.totalorder %s18, 1
    %p50 = por %p48, %p49
    %p51 = scmp.ne.s32.totalorder %s40, %s41
    %p52 = scmp.eq.s32.totalorder %s18, 0
    %p53 = por %p51, %p52
    %p54 = scmp.ne.s32.totalorder %s40, %s41
    %p55 = scmp.eq.s32.totalorder %s19, 1
    %p56 = por %p54, %p55
    %p58 = scmp.ne.s32.totalorder %s41, %s57
    %p59 = scmp.eq.s32.totalorder %s19, 0
    %p60 = por %p58, %p59
    %s62 = sadd.s32 %s61, 1
    %p65 = scmp.eq.s32.totalorder %s13, 1
    %p66 = scmp.ne.s32.totalorder %s61, %s63
    %p67 = scmp.eq.s32.totalorder %s13, 0
    %p68 = por %p66, %p67
    %p69 = scmp.ne.s32.totalorder %s61, %s63
    %p70 = scmp.eq.s32.totalorder %s18, 1
    %p71 = por %p69, %p70
    %p72 = scmp.ne.s32.totalorder %s63, %s64
    %p73 = scmp.eq.s32.totalorder %s18, 0
    %p74 = por %p72, %p73
    %p75 = scmp.ne.s32.totalorder %s63, %s64
    %p76 = scmp.eq.s32.totalorder %s19, 1
    %p77 = por %p75, %p76
    %p79 = scmp.ne.s32.totalorder %s64, %s78
    %p80 = scmp.eq.s32.totalorder %s19, 0
    %p81 = por %p79, %p80
    %s83 = sadd.s32 %s82, 1
    %p86 = scmp.eq.s32.totalorder %s13, 1
    %p87 = scmp.ne.s32.totalorder %s82, %s84
    %p88 = scmp.eq.s32.totalorder %s13, 0
    %p89 = por %p87, %p88
    %p90 = scmp.ne.s32.totalorder %s82, %s84
    %p91 = scmp.eq.s32.totalorder %s18, 1
    %p92 = por %p90, %p91
    %p93 = scmp.ne.s32.totalorder %s84, %s85
    %p94 = scmp.eq.s32.totalorder %s18, 0
    %p95 = por %p93, %p94
    %p96 = scmp.ne.s32.totalorder %s84, %s85
    %p97 = scmp.eq.s32.totalorder %s19, 1
    %p98 = por %p96, %p97
    %p100 = scmp.ne.s32.totalorder %s85, %s99
    %p101 = scmp.eq.s32.totalorder %s19, 0
    %p102 = por %p100, %p101
    %s104 = sadd.s32 %s103, 1
    %p107 = scmp.eq.s32.totalorder %s13, 1
    %p108 = scmp.ne.s32.totalorder %s103, %s105
    %p109 = scmp.eq.s32.totalorder %s13, 0
    %p110 = por %p108, %p109
    %p111 = scmp.ne.s32.totalorder %s103, %s105
    %p112 = scmp.eq.s32.totalorder %s18, 1
    %p113 = por %p111, %p112
    %p114 = scmp.ne.s32.totalorder %s105, %s106
    %p115 = scmp.eq.s32.totalorder %s18, 0
    %p116 = por %p114, %p115
    %p117 = scmp.ne.s32.totalorder %s105, %s106
    %p118 = scmp.eq.s32.totalorder %s19, 1
    %p119 = por %p117, %p118
    %p121 = scmp.ne.s32.totalorder %s106, %s120
    %p122 = scmp.eq.s32.totalorder %s19, 0
    %p123 = por %p121, %p122
    %s124 = ssub.s32 %s20, %s32
    %s125 = ssub.s32 %s21, %s28
    %s126 = sor.u32 %s124, %s125
    %p127 = scmp.eq.s32.totalorder %s126, 0
    %s129 = sadd.s32 %s128, 1
    %s130 = scalar_select %p127, %s128, %s129
    %p133 = pneg %p127
    %p134 = scmp.eq.s32.totalorder %s13, 1
    %p135 = por %p133, %p134
    %p136 = scmp.ne.s32.totalorder %s128, %s131
    %p137 = scmp.eq.s32.totalorder %s13, 0
    %p138 = por %p136, %p137
    %p139 = scmp.ne.s32.totalorder %s128, %s131
    %p140 = scmp.eq.s32.totalorder %s18, 1
    %p141 = por %p139, %p140
    %p142 = scmp.ne.s32.totalorder %s131, %s132
    %p143 = scmp.eq.s32.totalorder %s18, 0
    %p144 = por %p142, %p143
    %p145 = scmp.ne.s32.totalorder %s131, %s132
    %p146 = scmp.eq.s32.totalorder %s19, 1
    %p147 = por %p145, %p146
    %p149 = scmp.ne.s32.totalorder %s132, %s148
    %p150 = scmp.eq.s32.totalorder %s19, 0
    %p151 = por %p149, %p150
    %s152 = ssub.s32 %s20, %s32
    %s153 = ssub.s32 %s21, %s28
    %s154 = sor.u32 %s152, %s153
    %p155 = scmp.eq.s32.totalorder %s154, 0
    %s157 = sadd.s32 %s156, 1
    %s158 = scalar_select %p155, %s156, %s157
    %p161 = pneg %p155
    %p162 = scmp.eq.s32.totalorder %s13, 1
    %p163 = por %p161, %p162
    %p164 = scmp.ne.s32.totalorder %s156, %s159
    %p165 = scmp.eq.s32.totalorder %s13, 0
    %p166 = por %p164, %p165
    %p167 = scmp.ne.s32.totalorder %s156, %s159
    %p168 = scmp.eq.s32.totalorder %s18, 1
    %p169 = por %p167, %p168
    %p170 = scmp.ne.s32.totalorder %s159, %s160
    %p171 = scmp.eq.s32.totalorder %s18, 0
    %p172 = por %p170, %p171
    %p173 = scmp.ne.s32.totalorder %s159, %s160
    %p174 = scmp.eq.s32.totalorder %s19, 1
    %p175 = por %p173, %p174
    %p177 = scmp.ne.s32.totalorder %s160, %s176
    %p178 = scmp.eq.s32.totalorder %s19, 0
    %p179 = por %p177, %p178
    %s180 = ssub.s32 %s20, %s32
    %s181 = ssub.s32 %s21, %s28
    %s182 = sor.u32 %s180, %s181
    %p183 = scmp.eq.s32.totalorder %s182, 0
    %s185 = sadd.s32 %s184, 1
    %s186 = scalar_select %p183, %s184, %s185
    %p189 = pneg %p183
    %p190 = scmp.eq.s32.totalorder %s13, 1
    %p191 = por %p189, %p190
    %p192 = scmp.ne.s32.totalorder %s184, %s187
    %p193 = scmp.eq.s32.totalorder %s13, 0
    %p194 = por %p192, %p193
    %p195 = scmp.ne.s32.totalorder %s184, %s187
    %p196 = scmp.eq.s32.totalorder %s18, 1
    %p197 = por %p195, %p196
    %p198 = scmp.ne.s32.totalorder %s187, %s188
    %p199 = scmp.eq.s32.totalorder %s18, 0
    %p200 = por %p198, %p199
    %p201 = scmp.ne.s32.totalorder %s187, %s188
    %p202 = scmp.eq.s32.totalorder %s19, 1
    %p203 = por %p201, %p202
    %p205 = scmp.ne.s32.totalorder %s188, %s204
    %p206 = scmp.eq.s32.totalorder %s19, 0
    %p207 = por %p205, %p206
    %p208 = scmp.le.s32.totalorder 1, %s13
    %p209 = scmp.lt.s32.totalorder %s13, 3
    %p210 = pnand %p208, %p209
    %p211 = pneg %p210
    // Predicated region
    $region9: #{vector_quantizer_forward.1} parent=5 // pred_check
      _
    $region10: #{vector_quantizer_forward.1} parent=5 // pred_check_branch
      %213 = sbr.rel (%p210) target = $region12
    $region11: #{vector_quantizer_forward.1} parent=5 // pred_region
      %s214 = ssub.s32 %s13, 1
      // Predicated region
      $region13: #{vector_quantizer_forward.1} parent=11 // pred_check
        %p215 = pneg %p74
      $region14: #{vector_quantizer_forward.1} parent=11 // pred_check_branch
        %217 = sbr.rel (%p215) target = $region16
      $region15: #{vector_quantizer_forward.1} parent=11 // pred_region
        _
      $region16: #{vector_quantizer_forward.1} parent=11 // pred_fallthru
        _
      // Predicated region
      $region17: #{vector_quantizer_forward.1} parent=11 // pred_check
        %p218 = pneg %p95
      $region18: #{vector_quantizer_forward.1} parent=11 // pred_check_branch
        %220 = sbr.rel (%p218) target = $region20
      $region19: #{vector_quantizer_forward.1} parent=11 // pred_region
        _
      $region20: #{vector_quantizer_forward.1} parent=11 // pred_fallthru
        _
      // Predicated region
      $region21: #{vector_quantizer_forward.1} parent=11 // pred_check
        %p221 = pneg %p116
      $region22: #{vector_quantizer_forward.1} parent=11 // pred_check_branch
        %223 = sbr.rel (%p221) target = $region24
      $region23: #{vector_quantizer_forward.1} parent=11 // pred_region
        _
      $region24: #{vector_quantizer_forward.1} parent=11 // pred_fallthru
        _
    $region12: #{vector_quantizer_forward.1} parent=5 // pred_fallthru
      _
    %p224 = scmp.lt.s32.totalorder %s13, 2
    // Predicated region
    $region25: #{vector_quantizer_forward.1} parent=5 // pred_check
      %p225 = pneg %p224
    $region26: #{vector_quantizer_forward.1} parent=5 // pred_check_branch
      %227 = sbr.rel (%p225) target = $region28
    $region27: #{vector_quantizer_forward.1} parent=5 // pred_region
      // Predicated region
      $region29: #{vector_quantizer_forward.1} parent=27 // pred_check
        %p228 = pneg %p47
      $region30: #{vector_quantizer_forward.1} parent=27 // pred_check_branch
        %230 = sbr.rel (%p228) target = $region32
      $region31: #{vector_quantizer_forward.1} parent=27 // pred_region
        %s231 = smul.u32 2, %s21
        %p232 = scmp.lt.s32.totalorder %s20, 1
        %s233 = scalar_select %p232, %s20, 1
        %p234 = scmp.lt.s32.totalorder %s231, 1
        %s235 = scalar_select %p234, %s231, 1
        %s236 = smul.addr %s233, 8
        %s237 = sadd.s32 %s235, %s236
        %s238 = smul.addr %s237, 8
        %s239 = scalar_lea.vmem %s0, %s238
        %s240 = smul.u32 2, %s21
      $region32: #{vector_quantizer_forward.1} parent=27 // pred_fallthru
        _
    $region28: #{vector_quantizer_forward.1} parent=5 // pred_fallthru
      _
    %p241 = scmp.le.s32.totalorder 1, %s13
    %p242 = scmp.lt.s32.totalorder %s13, 3
    %p243 = pnand %p241, %p242
    %p244 = pneg %p243
    // Predicated region
    $region33: #{vector_quantizer_forward.1} parent=5 // pred_check
      _
    $region34: #{vector_quantizer_forward.1} parent=5 // pred_check_branch
      %246 = sbr.rel (%p243) target = $region36
    $region35: #{vector_quantizer_forward.1} parent=5 // pred_region
      %s247 = ssub.s32 %s13, 1
      %s248 = smul.u32 2, %s23
      %p249 = scmp.lt.s32.totalorder %s22, 1
      %s250 = scalar_select %p249, %s22, 1
      %p251 = scmp.lt.s32.totalorder %s248, 1
      %s252 = scalar_select %p251, %s248, 1
      %s253 = smul.addr %s250, 8
      %s254 = sadd.s32 %s252, %s253
      %s255 = smul.addr %s254, 8
      %s256 = scalar_lea.vmem %s0, %s255
      %p257 = pneg %p53
      %p258 = pneg %p50
      %p259 = pneg %p74
      %p260 = pneg %p71
      %p261 = pneg %p95
      %p262 = pneg %p92
      %p263 = pneg %p116
      %p264 = pneg %p113
      %p265 = pneg %p144
      %p266 = pneg %p141
      %s267 = smul.u32 2, %s23
      %p268 = scmp.lt.s32.totalorder %s22, 1
      %s269 = scalar_select %p268, %s22, 1
      %p270 = scmp.lt.s32.totalorder %s267, 1
      %s271 = scalar_select %p270, %s267, 1
      %s272 = smul.addr %s269, 8
      %s273 = sadd.s32 %s271, %s272
      %s274 = smul.addr %s273, 8
      %s275 = scalar_lea.vmem %s4, %s274
      %p276 = pneg %p172
      %p277 = pneg %p169
      %s278 = smul.u32 2, %s23
      %p279 = scmp.lt.s32.totalorder %s22, 1
      %s280 = scalar_select %p279, %s22, 1
      %p281 = scmp.lt.s32.totalorder %s278, 1
      %s282 = scalar_select %p281, %s278, 1
      %s283 = smul.addr %s280, 2
      %s284 = sadd.s32 %s282, %s283
      %s285 = scalar_lea.vmem %s5, %s284
      %p286 = pneg %p200
      %p287 = pneg %p197
      %s288 = smul.u32 2, %s23
      %p289 = scmp.lt.s32.totalorder %s22, 1
      %s290 = scalar_select %p289, %s22, 1
      %p291 = scmp.lt.s32.totalorder %s288, 1
      %s292 = scalar_select %p291, %s288, 1
      %s293 = smul.addr %s290, 2
      %s294 = sadd.s32 %s292, %s293
      %s295 = scalar_lea.vmem %s6, %s294
      %s296 = smul.u32 2, %s23
      %p297 = scmp.lt.s32.totalorder %s22, 1
      %s298 = scalar_select %p297, %s22, 1
      %p299 = scmp.lt.s32.totalorder %s296, 1
      %s300 = scalar_select %p299, %s296, 1
      %s301 = smul.addr %s298, 8
      %s302 = sadd.s32 %s300, %s301
      %s303 = smul.addr %s302, 8
      %s304 = scalar_lea.vmem %s0, %s303
      %s305 = smul.u32 2, %s23
      %s306 = smul.u32 2, %s23
      %p307 = scmp.lt.s32.totalorder %s22, 1
      %s308 = scalar_select %p307, %s22, 1
      %p309 = scmp.lt.s32.totalorder %s306, 1
      %s310 = scalar_select %p309, %s306, 1
      %s311 = smul.addr %s308, 8
      %s312 = sadd.s32 %s310, %s311
      %s313 = smul.addr %s312, 8
      %s314 = scalar_lea.vmem %s4, %s313
      %s315 = smul.u32 2, %s23
      %s316 = smul.u32 2, %s23
      %p317 = scmp.lt.s32.totalorder %s22, 1
      %s318 = scalar_select %p317, %s22, 1
      %p319 = scmp.lt.s32.totalorder %s316, 1
      %s320 = scalar_select %p319, %s316, 1
      %s321 = smul.addr %s318, 2
      %s322 = sadd.s32 %s320, %s321
      %s323 = scalar_lea.vmem %s5, %s322
      %s324 = smul.u32 2, %s23
      %s325 = smul.u32 2, %s23
      %p326 = scmp.lt.s32.totalorder %s22, 1
      %s327 = scalar_select %p326, %s22, 1
      %p328 = scmp.lt.s32.totalorder %s325, 1
      %s329 = scalar_select %p328, %s325, 1
      %s330 = smul.addr %s327, 2
      %s331 = sadd.s32 %s329, %s330
      %s332 = scalar_lea.vmem %s6, %s331
      %s333 = smul.u32 2, %s23
      %v334 = vld [vmem:[%s304] sm:$0xff]
      %v335 = vld [vmem:[%s304 + $0x8] sm:$0xff]
      %v336 = vld [vmem:[%s304 + $0x10] sm:$0xff]
      %v337 = vld [vmem:[%s304 + $0x18] sm:$0xff]
      %v338 = vld [vmem:[%s304 + $0x20] sm:$0xff]
      %v339 = vld [vmem:[%s304 + $0x28] sm:$0xff]
      %v340 = vld [vmem:[%s304 + $0x30] sm:$0xff]
      %v341 = vld [vmem:[%s304 + $0x38] sm:$0xff]
      %v342 = vld [vmem:[%s1] sm:$0xff]
      %v343 = vld [vmem:[%s1 + $0x8] sm:$0xff]
      %v344 = vld [vmem:[%s1 + $0x10] sm:$0xff]
      %v345 = vld [vmem:[%s1 + $0x18] sm:$0xff]
      %v346 = vld [vmem:[%s1 + $0x20] sm:$0xff]
      %v347 = vld [vmem:[%s1 + $0x28] sm:$0xff]
      %v348 = vld [vmem:[%s1 + $0x30] sm:$0xff]
      %v349 = vld [vmem:[%s1 + $0x38] sm:$0xff]
      %v350 = vld [vmem:[%s2] sm:$0xff]
      %v351 = vld [vmem:[%s2 + $0x8] sm:$0xff]
      %v352 = vld [vmem:[%s2 + $0x10] sm:$0xff]
      %v353 = vld [vmem:[%s2 + $0x18] sm:$0xff]
      %v354 = vld [vmem:[%s3] sm:$0xff]
      %v355 = vld [vmem:[%s3 + $0x8] sm:$0xff]
      %v356 = vld [vmem:[%s3 + $0x10] sm:$0xff]
      %v357 = vld [vmem:[%s3 + $0x18] sm:$0xff]
      %v358 = vld [vmem:[%s3 + $0x20] sm:$0xff]
      %v359 = vld [vmem:[%s3 + $0x28] sm:$0xff]
      %v360 = vld [vmem:[%s3 + $0x30] sm:$0xff]
      %v361 = vld [vmem:[%s3 + $0x38] sm:$0xff]
      %363 = vset.pattern.permute.xlu0 0
      %364 = vperm.xlu0 %363, %v354
      %v365 = vpop.permute.xlu0 %364
      %368 = vset.pattern.permute.xlu0 0
      %369 = vperm.xlu0 %368, %v355
      %v370 = vpop.permute.xlu0 %369
      %373 = vset.pattern.permute.xlu0 0
      %374 = vperm.xlu0 %373, %v356
      %v375 = vpop.permute.xlu0 %374
      %378 = vset.pattern.permute.xlu0 0
      %379 = vperm.xlu0 %378, %v357
      %v380 = vpop.permute.xlu0 %379
      %383 = vset.pattern.permute.xlu0 0
      %384 = vperm.xlu0 %383, %v358
      %v385 = vpop.permute.xlu0 %384
      %388 = vset.pattern.permute.xlu0 0
      %389 = vperm.xlu0 %388, %v359
      %v390 = vpop.permute.xlu0 %389
      %393 = vset.pattern.permute.xlu0 0
      %394 = vperm.xlu0 %393, %v360
      %v395 = vpop.permute.xlu0 %394
      %398 = vset.pattern.permute.xlu0 0
      %399 = vperm.xlu0 %398, %v361
      %v400 = vpop.permute.xlu0 %399
      %vm402 = vcmask 261120
      %v404 = vsel %vm402, %v342, 0
      %v407 = vsel %vm402, %v343, 0
      %v410 = vsel %vm402, %v344, 0
      %v413 = vsel %vm402, %v345, 0
      %v416 = vsel %vm402, %v346, 0
      %v419 = vsel %vm402, %v347, 0
      %v422 = vsel %vm402, %v348, 0
      %v425 = vsel %vm402, %v349, 0
      %427 = vmatpush.msra.mxu0 0.0
      %428 = vmatpush.msra.mxu0 0.0
      %429 = vmatpush.msra.mxu0 0.0
      %430 = vmatpush.msra.mxu0 0.0
      %431 = vmatpush.msra.mxu0 0.0
      %432 = vmatpush.msra.mxu0 0.0
      %433 = vmatpush.msra.mxu0 0.0
      %434 = vmatpush.msra.mxu0 0.0
      %435 = vmatpush.msra.mxu0 0.0
      %436 = vmatpush.msra.mxu0 0.0
      %437 = vmatpush.msra.mxu0 0.0
      %438 = vmatpush.msra.mxu0 0.0
      %439 = vmatpush.msra.mxu0 %v340
      %440 = vmatpush.msra.mxu0 %v338
      %441 = vmatpush.msra.mxu0 %v336
      %442 = vmatpush.msra.mxu0 %v334
      %443 = vmatmul.f32.gmra.mxu0 %v404
      %v444 = vpop.f32.mrf.mxu0
      %v445 = vadd.f32 %v365, %v444
      %446 = vmatmul.f32.gmra.mxu0 %v407
      %v447 = vpop.f32.mrf.mxu0
      %v448 = vadd.f32 %v370, %v447
      %449 = vmatmul.f32.gmra.mxu0 %v410
      %v450 = vpop.f32.mrf.mxu0
      %v451 = vadd.f32 %v375, %v450
      %452 = vmatmul.f32.gmra.mxu0 %v413
      %v453 = vpop.f32.mrf.mxu0
      %v454 = vadd.f32 %v380, %v453
      %455 = vmatmul.f32.gmra.mxu0 %v416
      %v456 = vpop.f32.mrf.mxu0
      %v457 = vadd.f32 %v385, %v456
      %458 = vmatmul.f32.gmra.mxu0 %v419
      %v459 = vpop.f32.mrf.mxu0
      %v460 = vadd.f32 %v390, %v459
      %461 = vmatmul.f32.gmra.mxu0 %v422
      %v462 = vpop.f32.mrf.mxu0
      %v463 = vadd.f32 %v395, %v462
      %464 = vmatmul.f32.gmra.mxu0 %v425
      %v465 = vpop.f32.mrf.mxu0
      %v466 = vadd.f32 %v400, %v465
      %467 = vdwg.mxu0
      %468 = vmatpush.msra.mxu0 0.0
      %469 = vmatpush.msra.mxu0 0.0
      %470 = vmatpush.msra.mxu0 0.0
      %471 = vmatpush.msra.mxu0 0.0
      %472 = vmatpush.msra.mxu0 0.0
      %473 = vmatpush.msra.mxu0 0.0
      %474 = vmatpush.msra.mxu0 0.0
      %475 = vmatpush.msra.mxu0 0.0
      %476 = vmatpush.msra.mxu0 0.0
      %477 = vmatpush.msra.mxu0 0.0
      %478 = vmatpush.msra.mxu0 0.0
      %479 = vmatpush.msra.mxu0 0.0
      %480 = vmatpush.msra.mxu0 %v341
      %481 = vmatpush.msra.mxu0 %v339
      %482 = vmatpush.msra.mxu0 %v337
      %483 = vmatpush.msra.mxu0 %v335
      %484 = vmatmul.f32.gmra.mxu0 %v404
      %v485 = vpop.f32.mrf.mxu0
      %v486 = vadd.f32 %v365, %v485
      %487 = vmatmul.f32.gmra.mxu0 %v407
      %v488 = vpop.f32.mrf.mxu0
      %v489 = vadd.f32 %v370, %v488
      %490 = vmatmul.f32.gmra.mxu0 %v410
      %v491 = vpop.f32.mrf.mxu0
      %v492 = vadd.f32 %v375, %v491
      %493 = vmatmul.f32.gmra.mxu0 %v413
      %v494 = vpop.f32.mrf.mxu0
      %v495 = vadd.f32 %v380, %v494
      %496 = vmatmul.f32.gmra.mxu0 %v416
      %v497 = vpop.f32.mrf.mxu0
      %v498 = vadd.f32 %v385, %v497
      %499 = vmatmul.f32.gmra.mxu0 %v419
      %v500 = vpop.f32.mrf.mxu0
      %v501 = vadd.f32 %v390, %v500
      %502 = vmatmul.f32.gmra.mxu0 %v422
      %v503 = vpop.f32.mrf.mxu0
      %v504 = vadd.f32 %v395, %v503
      %505 = vmatmul.f32.gmra.mxu0 %v425
      %v506 = vpop.f32.mrf.mxu0
      %v507 = vadd.f32 %v400, %v506
      %508 = vdwg.mxu0
      %v509 = vmin.f32 %v445, %v451
      %v510 = vmin.f32 %v448, %v454
      %v511 = vmin.f32 %v509, %v457
      %v512 = vmin.f32 %v510, %v460
      %v513 = vmin.f32 %v511, %v463
      %v514 = vmin.f32 %v512, %v466
      %v515 = vmin.f32 %v513, %v514
      %v516 = vrot.slane %v515, 4
      %v517 = vmin.f32 %v515, %v516
      %v518 = vrot.slane %v517, 2
      %v519 = vmin.f32 %v517, %v518
      %v520 = vrot.slane %v519, 1
      %v521 = vmin.f32 %v519, %v520
      %v522 = vmin.f32 %v486, %v492
      %v523 = vmin.f32 %v489, %v495
      %v524 = vmin.f32 %v522, %v498
      %v525 = vmin.f32 %v523, %v501
      %v526 = vmin.f32 %v524, %v504
      %v527 = vmin.f32 %v525, %v507
      %v528 = vmin.f32 %v526, %v527
      %v529 = vrot.slane %v528, 4
      %v530 = vmin.f32 %v528, %v529
      %v531 = vrot.slane %v530, 2
      %v532 = vmin.f32 %v530, %v531
      %v533 = vrot.slane %v532, 1
      %v534 = vmin.f32 %v532, %v533
      %v535 = vlaneseq
      %v536 = vshrl.u32 %v535, 7
      %v537 = vadd.s32 %v536, 8
      %v538 = vadd.s32 %v536, 16
      %v539 = vadd.s32 %v536, 24
      %v540 = vadd.s32 %v536, 32
      %v541 = vadd.s32 %v536, 40
      %v542 = vadd.s32 %v536, 48
      %v543 = vadd.s32 %v536, 56
      %vm544 = vcmp.eq.f32.partialorder %v445, %v521
      %vm545 = vcmp.eq.f32.partialorder %v486, %v534
      %vm546 = vcmp.eq.f32.partialorder %v448, %v521
      %vm547 = vcmp.eq.f32.partialorder %v489, %v534
      %vm548 = vcmp.eq.f32.partialorder %v451, %v521
      %vm549 = vcmp.eq.f32.partialorder %v492, %v534
      %vm550 = vcmp.eq.f32.partialorder %v454, %v521
      %vm551 = vcmp.eq.f32.partialorder %v495, %v534
      %vm552 = vcmp.eq.f32.partialorder %v457, %v521
      %vm553 = vcmp.eq.f32.partialorder %v498, %v534
      %vm554 = vcmp.eq.f32.partialorder %v460, %v521
      %vm555 = vcmp.eq.f32.partialorder %v501, %v534
      %vm556 = vcmp.eq.f32.partialorder %v463, %v521
      %vm557 = vcmp.eq.f32.partialorder %v504, %v534
      %vm558 = vcmp.eq.f32.partialorder %v466, %v521
      %vm559 = vcmp.eq.f32.partialorder %v507, %v534
      %v560 = vsel %vm544, %v536, 64
      %v561 = vsel %vm545, %v536, 64
      %v562 = vsel %vm546, %v537, 64
      %v563 = vsel %vm547, %v537, 64
      %v564 = vsel %vm548, %v538, 64
      %v565 = vsel %vm549, %v538, 64
      %v566 = vsel %vm550, %v539, 64
      %v567 = vsel %vm551, %v539, 64
      %v568 = vsel %vm552, %v540, 64
      %v569 = vsel %vm553, %v540, 64
      %v570 = vsel %vm554, %v541, 64
      %v571 = vsel %vm555, %v541, 64
      %v572 = vsel %vm556, %v542, 64
      %v573 = vsel %vm557, %v542, 64
      %v574 = vsel %vm558, %v543, 64
      %v575 = vsel %vm559, %v543, 64
      %vm576 = vcmp.lt.s32.totalorder %v560, %v564
      %v577 = vsel %vm576, %v560, %v564
      %vm578 = vcmp.lt.s32.totalorder %v562, %v566
      %v579 = vsel %vm578, %v562, %v566
      %vm580 = vcmp.lt.s32.totalorder %v577, %v568
      %v581 = vsel %vm580, %v577, %v568
      %vm582 = vcmp.lt.s32.totalorder %v579, %v570
      %v583 = vsel %vm582, %v579, %v570
      %vm584 = vcmp.lt.s32.totalorder %v581, %v572
      %v585 = vsel %vm584, %v581, %v572
      %vm586 = vcmp.lt.s32.totalorder %v583, %v574
      %v587 = vsel %vm586, %v583, %v574
      %vm588 = vcmp.lt.s32.totalorder %v585, %v587
      %v589 = vsel %vm588, %v585, %v587
      %v590 = vrot.slane %v589, 4
      %vm591 = vcmp.lt.s32.totalorder %v589, %v590
      %v592 = vsel %vm591, %v589, %v590
      %v593 = vrot.slane %v592, 2
      %vm594 = vcmp.lt.s32.totalorder %v592, %v593
      %v595 = vsel %vm594, %v592, %v593
      %v596 = vrot.slane %v595, 1
      %vm597 = vcmp.lt.s32.totalorder %v595, %v596
      %v598 = vsel %vm597, %v595, %v596
      %vm599 = vcmp.lt.s32.totalorder %v561, %v565
      %v600 = vsel %vm599, %v561, %v565
      %vm601 = vcmp.lt.s32.totalorder %v563, %v567
      %v602 = vsel %vm601, %v563, %v567
      %vm603 = vcmp.lt.s32.totalorder %v600, %v569
      %v604 = vsel %vm603, %v600, %v569
      %vm605 = vcmp.lt.s32.totalorder %v602, %v571
      %v606 = vsel %vm605, %v602, %v571
      %vm607 = vcmp.lt.s32.totalorder %v604, %v573
      %v608 = vsel %vm607, %v604, %v573
      %vm609 = vcmp.lt.s32.totalorder %v606, %v575
      %v610 = vsel %vm609, %v606, %v575
      %vm611 = vcmp.lt.s32.totalorder %v608, %v610
      %v612 = vsel %vm611, %v608, %v610
      %v613 = vrot.slane %v612, 4
      %vm614 = vcmp.lt.s32.totalorder %v612, %v613
      %v615 = vsel %vm614, %v612, %v613
      %v616 = vrot.slane %v615, 2
      %vm617 = vcmp.lt.s32.totalorder %v615, %v616
      %v618 = vsel %vm617, %v615, %v616
      %v619 = vrot.slane %v618, 1
      %vm620 = vcmp.lt.s32.totalorder %v618, %v619
      %v621 = vsel %vm620, %v618, %v619
      %vm622 = vcmp.eq.s32.totalorder %v536, %v598
      %vm623 = vcmp.eq.s32.totalorder %v536, %v621
      %vm624 = vcmp.eq.s32.totalorder %v537, %v598
      %vm625 = vcmp.eq.s32.totalorder %v537, %v621
      %vm626 = vcmp.eq.s32.totalorder %v538, %v598
      %vm627 = vcmp.eq.s32.totalorder %v538, %v621
      %vm628 = vcmp.eq.s32.totalorder %v539, %v598
      %vm629 = vcmp.eq.s32.totalorder %v539, %v621
      %vm630 = vcmp.eq.s32.totalorder %v540, %v598
      %vm631 = vcmp.eq.s32.totalorder %v540, %v621
      %vm632 = vcmp.eq.s32.totalorder %v541, %v598
      %vm633 = vcmp.eq.s32.totalorder %v541, %v621
      %vm634 = vcmp.eq.s32.totalorder %v542, %v598
      %vm635 = vcmp.eq.s32.totalorder %v542, %v621
      %vm636 = vcmp.eq.s32.totalorder %v543, %v598
      %vm637 = vcmp.eq.s32.totalorder %v543, %v621
      %v638 = vsel %vm622, 1, 0
      %v639 = vsel %vm623, 1, 0
      %v640 = vsel %vm624, 1, 0
      %v641 = vsel %vm625, 1, 0
      %v642 = vsel %vm626, 1, 0
      %v643 = vsel %vm627, 1, 0
      %v644 = vsel %vm628, 1, 0
      %v645 = vsel %vm629, 1, 0
      %v646 = vsel %vm630, 1, 0
      %v647 = vsel %vm631, 1, 0
      %v648 = vsel %vm632, 1, 0
      %v649 = vsel %vm633, 1, 0
      %v650 = vsel %vm634, 1, 0
      %v651 = vsel %vm635, 1, 0
      %v652 = vsel %vm636, 1, 0
      %v653 = vsel %vm637, 1, 0
      %v654 = vcvt.s32.f32 %v638
      %v655 = vcvt.s32.f32 %v639
      %v656 = vcvt.s32.f32 %v640
      %v657 = vcvt.s32.f32 %v641
      %v658 = vcvt.s32.f32 %v642
      %v659 = vcvt.s32.f32 %v643
      %v660 = vcvt.s32.f32 %v644
      %v661 = vcvt.s32.f32 %v645
      %v662 = vcvt.s32.f32 %v646
      %v663 = vcvt.s32.f32 %v647
      %v664 = vcvt.s32.f32 %v648
      %v665 = vcvt.s32.f32 %v649
      %v666 = vcvt.s32.f32 %v650
      %v667 = vcvt.s32.f32 %v651
      %v668 = vcvt.s32.f32 %v652
      %v669 = vcvt.s32.f32 %v653
      %vm670 = vcmask 523264
      %v672 = vsel %vm670, %v350, 0
      %v675 = vsel %vm670, %v351, 0
      %v678 = vsel %vm670, %v352, 0
      %v681 = vsel %vm670, %v353, 0
      %683 = vmatpush.msra.mxu0 0.0
      %684 = vmatpush.msra.mxu0 0.0
      %685 = vmatpush.msra.mxu0 0.0
      %686 = vmatpush.msra.mxu0 0.0
      %687 = vmatpush.msra.mxu0 0.0
      %688 = vmatpush.msra.mxu0 0.0
      %689 = vmatpush.msra.mxu0 0.0
      %690 = vmatpush.msra.mxu0 0.0
      %691 = vmatpush.msra.mxu0 %v668
      %692 = vmatpush.msra.mxu0 %v666
      %693 = vmatpush.msra.mxu0 %v664
      %694 = vmatpush.msra.mxu0 %v662
      %695 = vmatpush.msra.mxu0 %v660
      %696 = vmatpush.msra.mxu0 %v658
      %697 = vmatpush.msra.mxu0 %v656
      %698 = vmatpush.msra.mxu0 %v654
      %699 = vmatmul.f32.gmra.mxu0 %v672
      %v700 = vpop.f32.mrf.mxu0
      %v701 = vadd.f32 0.0, %v700
      %702 = vmatmul.f32.gmra.mxu0 %v675
      %v703 = vpop.f32.mrf.mxu0
      %v704 = vadd.f32 0.0, %v703
      %705 = vmatmul.f32.gmra.mxu0 %v678
      %v706 = vpop.f32.mrf.mxu0
      %v707 = vadd.f32 0.0, %v706
      %708 = vmatmul.f32.gmra.mxu0 %v681
      %v709 = vpop.f32.mrf.mxu0
      %v710 = vadd.f32 0.0, %v709
      %711 = vdwg.mxu0
      %712 = vmatpush.msra.mxu0 0.0
      %713 = vmatpush.msra.mxu0 0.0
      %714 = vmatpush.msra.mxu0 0.0
      %715 = vmatpush.msra.mxu0 0.0
      %716 = vmatpush.msra.mxu0 0.0
      %717 = vmatpush.msra.mxu0 0.0
      %718 = vmatpush.msra.mxu0 0.0
      %719 = vmatpush.msra.mxu0 0.0
      %720 = vmatpush.msra.mxu0 %v669
      %721 = vmatpush.msra.mxu0 %v667
      %722 = vmatpush.msra.mxu0 %v665
      %723 = vmatpush.msra.mxu0 %v663
      %724 = vmatpush.msra.mxu0 %v661
      %725 = vmatpush.msra.mxu0 %v659
      %726 = vmatpush.msra.mxu0 %v657
      %727 = vmatpush.msra.mxu0 %v655
      %728 = vmatmul.f32.gmra.mxu0 %v672
      %v729 = vpop.f32.mrf.mxu0
      %v730 = vadd.f32 0.0, %v729
      %731 = vmatmul.f32.gmra.mxu0 %v675
      %v732 = vpop.f32.mrf.mxu0
      %v733 = vadd.f32 0.0, %v732
      %734 = vmatmul.f32.gmra.mxu0 %v678
      %v735 = vpop.f32.mrf.mxu0
      %v736 = vadd.f32 0.0, %v735
      %737 = vmatmul.f32.gmra.mxu0 %v681
      %v738 = vpop.f32.mrf.mxu0
      %v739 = vadd.f32 0.0, %v738
      %740 = vdwg.mxu0
      %741 = vst [vmem:[%s314] sm:$0xff] %v701
      %742 = vst [vmem:[%s314 + $0x8] sm:$0xff] %v730
      %743 = vst [vmem:[%s314 + $0x10] sm:$0xff] %v704
      %744 = vst [vmem:[%s314 + $0x18] sm:$0xff] %v733
      %745 = vst [vmem:[%s314 + $0x20] sm:$0xff] %v707
      %746 = vst [vmem:[%s314 + $0x28] sm:$0xff] %v736
      %747 = vst [vmem:[%s314 + $0x30] sm:$0xff] %v710
      %748 = vst [vmem:[%s314 + $0x38] sm:$0xff] %v739
      %v749 = vrot.slane %v621, 7
      %vm750 = vcmask 1040384
      %v751 = vsel %vm750, %v598, %v749
      %v752 = vlaneseq
      %vm753 = vcmp.ge.s32.totalorder %v752, 0
      %vm754 = vcmp.lt.s32.totalorder %v752, 256
      %vm755 = vmand %vm753, %vm754
      %756 = vst.msk [vmem:[%s323] sm:$0x3] %vm755, %v751
      %v757 = vsub.f32 %v701, %v334
      %v758 = vsub.f32 %v730, %v335
      %v759 = vsub.f32 %v704, %v336
      %v760 = vsub.f32 %v733, %v337
      %v761 = vsub.f32 %v707, %v338
      %v762 = vsub.f32 %v736, %v339
      %v763 = vsub.f32 %v710, %v340
      %v764 = vsub.f32 %v739, %v341
      %v765 = vmul.f32 %v757, %v757
      %v766 = vmul.f32 %v758, %v758
      %v767 = vmul.f32 %v759, %v759
      %v768 = vmul.f32 %v760, %v760
      %v769 = vmul.f32 %v761, %v761
      %v770 = vmul.f32 %v762, %v762
      %v771 = vmul.f32 %v763, %v763
      %v772 = vmul.f32 %v764, %v764
      %v773 = vadd.f32 %v765, %v767
      %v774 = vadd.f32 %v773, %v769
      %v775 = vadd.f32 %v774, %v771
      %v776 = vrot.slane %v775, 4
      %v777 = vadd.f32 %v775, %v776
      %v778 = vrot.slane %v777, 2
      %v779 = vadd.f32 %v777, %v778
      %v780 = vrot.slane %v779, 1
      %v781 = vadd.f32 %v779, %v780
      %v782 = vadd.f32 %v766, %v768
      %v783 = vadd.f32 %v782, %v770
      %v784 = vadd.f32 %v783, %v772
      %v785 = vrot.slane %v784, 4
      %v786 = vadd.f32 %v784, %v785
      %v787 = vrot.slane %v786, 2
      %v788 = vadd.f32 %v786, %v787
      %v789 = vrot.slane %v788, 1
      %v790 = vadd.f32 %v788, %v789
      %v793 = vrot.slane %v790, 7
      %v794 = vsel %vm750, %v781, %v793
      %796 = vst.msk [vmem:[%s332] sm:$0x3] %vm755, %v794
      %s797 = smul.u32 2, %s23
      %p798 = scmp.lt.s32.totalorder %s22, 1
      %s799 = scalar_select %p798, %s22, 1
      %p800 = scmp.lt.s32.totalorder %s797, 1
      %s801 = scalar_select %p800, %s797, 1
      %s802 = smul.addr %s799, 8
      %s803 = sadd.s32 %s801, %s802
      %s804 = smul.addr %s803, 8
      %s805 = scalar_lea.vmem %s4, %s804
      %s806 = smul.u32 2, %s23
      %p807 = scmp.lt.s32.totalorder %s22, 1
      %s808 = scalar_select %p807, %s22, 1
      %p809 = scmp.lt.s32.totalorder %s806, 1
      %s810 = scalar_select %p809, %s806, 1
      %s811 = smul.addr %s808, 2
      %s812 = sadd.s32 %s810, %s811
      %s813 = scalar_lea.vmem %s5, %s812
      %s814 = smul.u32 2, %s23
      %p815 = scmp.lt.s32.totalorder %s22, 1
      %s816 = scalar_select %p815, %s22, 1
      %p817 = scmp.lt.s32.totalorder %s814, 1
      %s818 = scalar_select %p817, %s814, 1
      %s819 = smul.addr %s816, 2
      %s820 = sadd.s32 %s818, %s819
      %s821 = scalar_lea.vmem %s6, %s820
      // Predicated region
      $region37: #{vector_quantizer_forward.1} parent=35 // pred_check
        %p822 = pneg %p141
      $region38: #{vector_quantizer_forward.1} parent=35 // pred_check_branch
        %824 = sbr.rel (%p822) target = $region40
      $region39: #{vector_quantizer_forward.1} parent=35 // pred_region
        %s825 = smul.u32 2, %s23
      $region40: #{vector_quantizer_forward.1} parent=35 // pred_fallthru
        _
      // Predicated region
      $region41: #{vector_quantizer_forward.1} parent=35 // pred_check
        %p826 = pneg %p169
      $region42: #{vector_quantizer_forward.1} parent=35 // pred_check_branch
        %828 = sbr.rel (%p826) target = $region44
      $region43: #{vector_quantizer_forward.1} parent=35 // pred_region
        %s829 = smul.u32 2, %s23
      $region44: #{vector_quantizer_forward.1} parent=35 // pred_fallthru
        _
      // Predicated region
      $region45: #{vector_quantizer_forward.1} parent=35 // pred_check
        %p830 = pneg %p197
      $region46: #{vector_quantizer_forward.1} parent=35 // pred_check_branch
        %832 = sbr.rel (%p830) target = $region48
      $region47: #{vector_quantizer_forward.1} parent=35 // pred_region
        %s833 = smul.u32 2, %s23
      $region48: #{vector_quantizer_forward.1} parent=35 // pred_fallthru
        _
    $region36: #{vector_quantizer_forward.1} parent=5 // pred_fallthru
      _
    %p834 = scmp.le.s32.totalorder 2, %s13
    // Predicated region
    $region49: #{vector_quantizer_forward.1} parent=5 // pred_check
      %p835 = pneg %p834
    $region50: #{vector_quantizer_forward.1} parent=5 // pred_check_branch
      %837 = sbr.rel (%p835) target = $region52
    $region51: #{vector_quantizer_forward.1} parent=5 // pred_region
      %s838 = ssub.s32 %s13, 2
      // Predicated region
      $region53: #{vector_quantizer_forward.1} parent=51 // pred_check
        %p839 = pneg %p147
      $region54: #{vector_quantizer_forward.1} parent=51 // pred_check_branch
        %841 = sbr.rel (%p839) target = $region56
      $region55: #{vector_quantizer_forward.1} parent=51 // pred_region
        %s842 = smul.u32 2, %s25
        %p843 = scmp.lt.s32.totalorder %s24, 1
        %s844 = scalar_select %p843, %s24, 1
        %p845 = scmp.lt.s32.totalorder %s842, 1
        %s846 = scalar_select %p845, %s842, 1
        %s847 = smul.addr %s844, 8
        %s848 = sadd.s32 %s846, %s847
        %s849 = smul.addr %s848, 8
        %s850 = scalar_lea.vmem %s4, %s849
      $region56: #{vector_quantizer_forward.1} parent=51 // pred_fallthru
        _
      // Predicated region
      $region57: #{vector_quantizer_forward.1} parent=51 // pred_check
        %p851 = pneg %p175
      $region58: #{vector_quantizer_forward.1} parent=51 // pred_check_branch
        %853 = sbr.rel (%p851) target = $region60
      $region59: #{vector_quantizer_forward.1} parent=51 // pred_region
        %s854 = smul.u32 2, %s25
        %p855 = scmp.lt.s32.totalorder %s24, 1
        %s856 = scalar_select %p855, %s24, 1
        %p857 = scmp.lt.s32.totalorder %s854, 1
        %s858 = scalar_select %p857, %s854, 1
        %s859 = smul.addr %s856, 2
        %s860 = sadd.s32 %s858, %s859
        %s861 = scalar_lea.vmem %s5, %s860
      $region60: #{vector_quantizer_forward.1} parent=51 // pred_fallthru
        _
      // Predicated region
      $region61: #{vector_quantizer_forward.1} parent=51 // pred_check
        %p862 = pneg %p203
      $region62: #{vector_quantizer_forward.1} parent=51 // pred_check_branch
        %864 = sbr.rel (%p862) target = $region64
      $region63: #{vector_quantizer_forward.1} parent=51 // pred_region
        %s865 = smul.u32 2, %s25
        %p866 = scmp.lt.s32.totalorder %s24, 1
        %s867 = scalar_select %p866, %s24, 1
        %p868 = scmp.lt.s32.totalorder %s865, 1
        %s869 = scalar_select %p868, %s865, 1
        %s870 = smul.addr %s867, 2
        %s871 = sadd.s32 %s869, %s870
        %s872 = scalar_lea.vmem %s6, %s871
      $region64: #{vector_quantizer_forward.1} parent=51 // pred_fallthru
        _
    $region52: #{vector_quantizer_forward.1} parent=5 // pred_fallthru
      _
  $region6: #{vector_quantizer_forward.1} parent=0 // loop_footer
    %s17 = sadd.s32 1, %s13
  $region7: #{vector_quantizer_forward.1} parent=0 // loop_footer_branch
    %12 = sbr.rel target = $region3
  $region8: #{vector_quantizer_forward.1} parent=0 // loop_exit
    _

</llo_original>
